<compile_context>
chip_gen: v7x
topology: tpu7x:2x2x1
jax: 0.10.0
libtpu: 0.0.40
codegen_flags: <defaults>
</compile_context>

<pallas_src>
import jax
import jax.numpy as jnp
from jax.experimental import pallas as pl
from jax.experimental.pallas import tpu as pltpu


# ---------------------------------------------------------------------------
# Kernel: one grid step embeds a T-token chunk of one batch row.
#   ids_ref : (1, T, 1) int32  token ids of this chunk
#   emb_ref : (V, D)    f32    full embedding table (VMEM-resident, constant index)
#   pos_ref : (T, D)    f32    positional-encoding rows for this chunk
#   out_ref : (1, T, D) f32    dense output tile
# ---------------------------------------------------------------------------
def _embed_kernel(ids_ref, emb_ref, pos_ref, out_ref):
    ids_col = ids_ref[0]                                    # (T, 1) int32
    V = emb_ref.shape[0]
    T = pos_ref.shape[0]
    # One-hot gather on the MXU: onehot (T, V) @ table (V, D) -> (T, D).
    # TODO(synk): for large vocabularies (table not VMEM-resident) replace this
    # with a batched manual pltpu.make_async_copy row gather from HBM.
    vocab_iota = jax.lax.broadcasted_iota(jnp.int32, (T, V), 1)
    onehot = (vocab_iota == ids_col).astype(emb_ref.dtype)  # (T, V)
    tok = jnp.dot(onehot, emb_ref[...], preferred_element_type=jnp.float32)
    out_ref[0] = (tok + pos_ref[...]).astype(out_ref.dtype)


def _pick_seq_tile(S, max_tile=256):
    """Largest multiple of 8 that divides S (capped), else the full extent."""
    if S % 8 != 0:
        return S                      # full-extent block is always legal
    t = (min(S, max_tile) // 8) * 8
    while t >= 8:
        if S % t == 0:
            return t
        t -= 8
    return S


def transformer_embedding_forward(ids, emb_table, pos_enc, *, drop_prob=0.1,
                                  max_seq_tile=256):
    """ids: (B, S) int32; emb_table: (V, D) f32; pos_enc: (max_len, D) f32."""
    B, S = ids.shape
    V, D = emb_table.shape
    T = _pick_seq_tile(S, max_seq_tile)
    n_s = S // T

    pos = pos_enc[:S]                               # (S, D) — slice to seq len
    ids3 = ids.reshape(B, S, 1).astype(jnp.int32)   # (B, S, 1): chunk dim on sublanes

    grid_spec = pltpu.PrefetchScalarGridSpec(
        num_scalar_prefetch=0,
        grid=(B, n_s),
        in_specs=[
            # token-id chunk for this (batch, seq-chunk) step
            pl.BlockSpec((1, T, 1), lambda b, s: (b, s, 0)),
            # full embedding table, constant block index -> DMA'd once, VMEM-resident
            # (for large tables raise pltpu.CompilerParams(vmem_limit_bytes=...))
            pl.BlockSpec((V, D), lambda b, s: (0, 0)),
            # contiguous positional-encoding rows for this seq chunk
            pl.BlockSpec((T, D), lambda b, s: (s, 0)),
        ],
        out_specs=pl.BlockSpec((1, T, D), lambda b, s: (b, s, 0)),
    )

    out = pl.pallas_call(
        _embed_kernel,
        grid_spec=grid_spec,
        out_shape=jax.ShapeDtypeStruct((B, S, D), emb_table.dtype),
        compiler_params=pltpu.CompilerParams(
            dimension_semantics=("parallel", "parallel"),
        ),
    )(ids3, emb_table, pos)

    # TODO(synk): nn.Dropout(p=drop_prob) in training mode (random mask + 1/(1-p)
    # rescale via pltpu.prng_seed/prng_random_bits); eval-mode identity here.
    return out


# ---------------------------------------------------------------------------
# Deterministic parameter construction (mirrors the PyTorch __init__ shapes).
# ---------------------------------------------------------------------------
def make_sinusoid_encoding(max_len, d_model, dtype=jnp.float32):
    pos = jnp.arange(max_len, dtype=jnp.float32)[:, None]            # (L, 1)
    two_i = jnp.arange(0, d_model, 2, dtype=jnp.float32)[None, :]    # (1, D/2)
    angle = pos / jnp.power(10000.0, two_i / d_model)                # (L, D/2)
    pe = jnp.zeros((max_len, d_model), dtype=jnp.float32)
    pe = pe.at[:, 0::2].set(jnp.sin(angle))
    pe = pe.at[:, 1::2].set(jnp.cos(angle))
    return pe.astype(dtype)


def make_token_embedding(key, vocab_size, d_model, dtype=jnp.float32):
    # nn.Embedding(vocab_size, d_model): N(0,1) init (padding_idx row zeroed in
    # the original TokenEmbedding; row 1 here).
    table = jax.random.normal(key, (vocab_size, d_model), dtype=dtype)
    table = table.at[1, :].set(0.0)
    return table


def reference_forward(ids, emb_table, pos_enc):
    S = ids.shape[1]
    tok = emb_table[ids]              # (B, S, D)
    pos = pos_enc[:S][None, :, :]     # (1, S, D)
    return tok + pos


if __name__ == "__main__":
    key = jax.random.PRNGKey(0)
    k_emb, k_ids = jax.random.split(key)

    vocab_size = 64
    d_model = 128
    max_len = 64
    drop_prob = 0.1
    B, S = 2, 32

    emb_table = make_token_embedding(k_emb, vocab_size, d_model)
    pos_enc = make_sinusoid_encoding(max_len, d_model)
    ids = jax.random.randint(k_ids, (B, S), 0, vocab_size, dtype=jnp.int32)

    # max_seq_tile=16 -> T=16, grid=(2, 2): exercises both grid axes.
    out = transformer_embedding_forward(ids, emb_table, pos_enc,
                                        drop_prob=drop_prob, max_seq_tile=16)
    out = jax.block_until_ready(out)

    ref = reference_forward(ids, emb_table, pos_enc)
    assert out.shape == (B, S, d_model), out.shape
    assert jnp.allclose(out, ref, atol=1e-5, rtol=1e-5), "mismatch vs reference"

    print("KERNEL_OK")
</pallas_src>

<mosaic_0001>
module attributes {stable_mosaic.version = 11 : i64} {
  func.func @_embed_kernel(%arg0: i32, %arg1: i32, %arg2: memref<1x16x1xi32, #tpu.memory_space<vmem>>, %arg3: memref<64x128xf32, #tpu.memory_space<vmem>>, %arg4: memref<16x128xf32, #tpu.memory_space<vmem>>, %arg5: memref<1x16x128xf32, #tpu.memory_space<vmem>>) attributes {dimension_semantics = [#tpu.dimension_semantics<parallel>, #tpu.dimension_semantics<parallel>], iteration_bounds = array<i64: 2, 2>, scalar_prefetch = 0 : i64, scratch_operands = 0 : i64, tpu.core_type = #tpu.core_type<tc>, window_params = [{transform_indices = @transform_0, window_bounds = array<i64: 1, 16, 1>}, {pipeline_mode = #tpu.pipeline_mode<synchronous>, transform_indices = @transform_1, window_bounds = array<i64: 64, 128>}, {transform_indices = @transform_2, window_bounds = array<i64: 16, 128>}, {transform_indices = @transform_3, window_bounds = array<i64: 1, 16, 128>}]} {
    %c0 = arith.constant 0 : index
    %c0_0 = arith.constant 0 : index
    %c0_1 = arith.constant 0 : index
    %0 = vector.load %arg2[%c0, %c0_0, %c0_1] : memref<1x16x1xi32, #tpu.memory_space<vmem>>, vector<1x16x1xi32>
    %1 = vector.shape_cast %0 : vector<1x16x1xi32> to vector<16x1xi32>
    %2 = tpu.iota {dimensions = array<i32: 1>} : vector<16x64xi32>
    %3 = vector.broadcast %1 : vector<16x1xi32> to vector<16x64xi32>
    %4 = arith.cmpi eq, %2, %3 : vector<16x64xi32>
    %5 = arith.extui %4 : vector<16x64xi1> to vector<16x64xi32>
    %6 = arith.sitofp %5 : vector<16x64xi32> to vector<16x64xf32>
    %c0_2 = arith.constant 0 : index
    %c0_3 = arith.constant 0 : index
    %7 = vector.load %arg3[%c0_2, %c0_3] : memref<64x128xf32, #tpu.memory_space<vmem>>, vector<64x128xf32>
    %cst = arith.constant dense<0.000000e+00> : vector<16x128xf32>
    %8 = tpu.matmul %6, %7, %cst {dimension_numbers = #tpu.dot_dimension_numbers<[1], [0], [0], [1], [0, 0, 1, 1], [], []>} : vector<16x64xf32>, vector<64x128xf32>, vector<16x128xf32> -> vector<16x128xf32>
    %c0_4 = arith.constant 0 : index
    %c0_5 = arith.constant 0 : index
    %9 = vector.load %arg4[%c0_4, %c0_5] : memref<16x128xf32, #tpu.memory_space<vmem>>, vector<16x128xf32>
    %10 = arith.addf %8, %9 : vector<16x128xf32>
    %c0_6 = arith.constant 0 : index
    %c0_7 = arith.constant 0 : index
    %c0_8 = arith.constant 0 : index
    %11 = vector.load %arg5[%c0_6, %c0_7, %c0_8] : memref<1x16x128xf32, #tpu.memory_space<vmem>>, vector<1x16x128xf32>
    %12 = vector.shape_cast %11 : vector<1x16x128xf32> to vector<16x128xf32>
    %13 = vector.shape_cast %10 : vector<16x128xf32> to vector<1x16x128xf32>
    tpu.vector_store %arg5[%c0_6, %c0_7, %c0_8], %13 {strides = array<i32>} : memref<1x16x128xf32, #tpu.memory_space<vmem>>, vector<1x16x128xf32>,
    return
  }
  func.func @transform_0(%arg0: i32, %arg1: i32) -> (i32, i32, i32) {
    %c0_i32 = arith.constant 0 : i32
    %c0_i32_0 = arith.constant 0 : i32
    return %arg0, %arg1, %c0_i32 : i32, i32, i32
  }
  func.func @transform_1(%arg0: i32, %arg1: i32) -> (i32, i32) {
    %c0_i32 = arith.constant 0 : i32
    %c0_i32_0 = arith.constant 0 : i32
    %c0_i32_1 = arith.constant 0 : i32
    return %c0_i32, %c0_i32_0 : i32, i32
  }
  func.func @transform_2(%arg0: i32, %arg1: i32) -> (i32, i32) {
    %c0_i32 = arith.constant 0 : i32
    %c0_i32_0 = arith.constant 0 : i32
    return %arg1, %c0_i32 : i32, i32
  }
  func.func @transform_3(%arg0: i32, %arg1: i32) -> (i32, i32, i32) {
    %c0_i32 = arith.constant 0 : i32
    %c0_i32_0 = arith.constant 0 : i32
    return %arg0, %arg1, %c0_i32 : i32, i32, i32
  }
}

</mosaic_0001>

<llo_original>
// kernel: tpu_custom_call.1
$region0: #{tpu_custom_call.1}
  #allocation0 [shape = 'u32[]', space=smem, size = 0x4, offset = 0x4, fixed_abs, tag = 'smem constant byte address 0x4 - core index']
  #allocation1 [shape = 'u32[144,128]{1,0:T(1,128)}', space=vmem, size = 0x12000, scoped, tag = 'internal scratch']
  %s0 = inlined_call_operand.vmem [shape: s32[2,32,1], index: 0, kind: input, shape index: {}]
  %s1 = inlined_call_operand.vmem [shape: f32[64,128], index: 1, kind: input, shape index: {}]
  %s2 = inlined_call_operand.hbm [shape: f32[32,128], index: 2, kind: input, shape index: {}]
  %s3 = inlined_call_operand.hbm [shape: f32[2,32,128], index: 3, kind: output, shape index: {}]
  %s4 = sld [smem:[#allocation0]]
  $region49: #{tpu_custom_call.1} parent=0
    _
  %s6 = ssub.s32 1, %s4
  %s7 = scalar_select 0, %s6, %s4
  $region1: #{tpu_custom_call.1} parent=0
    #allocation2 [shape = 'u8[16384]{0}', space=vmem, size = 0x4000, scoped, tag = 'input window, operand 2']
    #allocation3 [shape = 's32[2]{0}', space=sflag, size = 0x8, scoped, tag = 'scoped memory for tpu_custom_call.1']
    #allocation4 [shape = 's32[2]{0}', space=sflag, size = 0x8, scoped, tag = 'scoped memory for tpu_custom_call.1']
    #allocation5 [shape = 'u8[16384]{0}', space=vmem, size = 0x4000, scoped, tag = 'output window, operand 0']
    %8 = vsyncpa [#allocation3], 0
    %s9 = scalar_lea.sflag [#allocation3], 1
    %10 = vsyncpa %s9, 0
    %11 = vsyncpa [#allocation4], 0
    %s12 = scalar_lea.sflag [#allocation4], 1
    %13 = vsyncpa %s12, 0
    loop: start=0, step=1, limit=6
    $region2: #{tpu_custom_call.1} parent=1 // loop_pre_header
      _
    $region3: #{tpu_custom_call.1} parent=1 // loop_header
      %s15 = sphi 0, %s19
      %p16 = scmp.ge.s32.totalorder %s15, 6
      %s22 = sphi 0, %s34
      %s23 = sphi 0, %s30
      %s24 = sphi 0, %s22
      %s25 = sphi 0, %s23
      %s26 = sphi 0, %s24
      %s27 = sphi 0, %s25
      %s39 = sphi 0, %s41
      %s42 = sphi 0, %s39
      %s43 = sphi 0, %s42
      %s59 = sphi 0, %s43
      %s63 = sphi 0, %s63
      %s65 = sphi 0, %s63
      %s66 = sphi 0, %s65
      %s80 = sphi 0, %s66
      %s86 = sphi 0, %s88
      %s89 = sphi 0, %s86
      %s90 = sphi 0, %s89
      %s106 = sphi 0, %s90
      %s114 = sphi 0, %s116
      %s117 = sphi 0, %s114
      %s118 = sphi 0, %s117
      %s134 = sphi 0, %s118
    $region4: #{tpu_custom_call.1} parent=1 // loop_header_branch
      %18 = sbr.rel (%p16) target = $region8
    $region5: #{tpu_custom_call.1} parent=1 // loop_body
      %s20 = ssub.s32 %s15, 1
      %s21 = ssub.s32 %s15, 2
      %s28 = sadd.s32 1, %s23
      %p29 = scmp.ge.s32.totalorder %s28, 2
      %s30 = scalar_select %p29, 0, %s28
      %s31 = sadd.s32 1, %s22
      %s32 = scalar_select %p29, %s31, %s22
      %p33 = scmp.ge.s32.totalorder %s32, 2
      %s34 = scalar_select %p33, 0, %s32
      %s35 = ssub.s32 %s22, %s34
      %s36 = ssub.s32 %s23, %s30
      %s37 = sor.u32 %s35, %s36
      %p38 = scmp.eq.s32.totalorder %s37, 0
      %s40 = sadd.s32 %s39, 1
      %s41 = scalar_select %p38, %s39, %s40
      %p44 = pneg %p38
      %p45 = scmp.eq.s32.totalorder %s15, 3
      %p46 = por %p44, %p45
      %p47 = scmp.ne.s32.totalorder %s39, %s42
      %p48 = scmp.eq.s32.totalorder %s15, 0
      %p49 = por %p47, %p48
      %p50 = scmp.ne.s32.totalorder %s39, %s42
      %p51 = scmp.eq.s32.totalorder %s20, 3
      %p52 = por %p50, %p51
      %p53 = scmp.ne.s32.totalorder %s42, %s43
      %p54 = scmp.eq.s32.totalorder %s20, 0
      %p55 = por %p53, %p54
      %p56 = scmp.ne.s32.totalorder %s42, %s43
      %p57 = scmp.eq.s32.totalorder %s21, 3
      %p58 = por %p56, %p57
      %p60 = scmp.ne.s32.totalorder %s43, %s59
      %p61 = scmp.eq.s32.totalorder %s21, 0
      %p62 = por %p60, %p61
      %s64 = sadd.s32 %s63, 1
      %p67 = scmp.eq.s32.totalorder %s15, 3
      %p68 = scmp.ne.s32.totalorder %s63, %s65
      %p69 = scmp.eq.s32.totalorder %s15, 0
      %p70 = por %p68, %p69
      %p71 = scmp.ne.s32.totalorder %s63, %s65
      %p72 = scmp.eq.s32.totalorder %s20, 3
      %p73 = por %p71, %p72
      %p74 = scmp.ne.s32.totalorder %s65, %s66
      %p75 = scmp.eq.s32.totalorder %s20, 0
      %p76 = por %p74, %p75
      %p77 = scmp.ne.s32.totalorder %s65, %s66
      %p78 = scmp.eq.s32.totalorder %s21, 3
      %p79 = por %p77, %p78
      %p81 = scmp.ne.s32.totalorder %s66, %s80
      %p82 = scmp.eq.s32.totalorder %s21, 0
      %p83 = por %p81, %p82
      %s84 = ssub.s32 %s23, %s30
      %p85 = scmp.eq.s32.totalorder %s84, 0
      %s87 = sadd.s32 %s86, 1
      %s88 = scalar_select %p85, %s86, %s87
      %p91 = pneg %p85
      %p92 = scmp.eq.s32.totalorder %s15, 3
      %p93 = por %p91, %p92
      %p94 = scmp.ne.s32.totalorder %s86, %s89
      %p95 = scmp.eq.s32.totalorder %s15, 0
      %p96 = por %p94, %p95
      %p97 = scmp.ne.s32.totalorder %s86, %s89
      %p98 = scmp.eq.s32.totalorder %s20, 3
      %p99 = por %p97, %p98
      %p100 = scmp.ne.s32.totalorder %s89, %s90
      %p101 = scmp.eq.s32.totalorder %s20, 0
      %p102 = por %p100, %p101
      %p103 = scmp.ne.s32.totalorder %s89, %s90
      %p104 = scmp.eq.s32.totalorder %s21, 3
      %p105 = por %p103, %p104
      %p107 = scmp.ne.s32.totalorder %s90, %s106
      %p108 = scmp.eq.s32.totalorder %s21, 0
      %p109 = por %p107, %p108
      %s110 = ssub.s32 %s22, %s34
      %s111 = ssub.s32 %s23, %s30
      %s112 = sor.u32 %s110, %s111
      %p113 = scmp.eq.s32.totalorder %s112, 0
      %s115 = sadd.s32 %s114, 1
      %s116 = scalar_select %p113, %s114, %s115
      %p119 = pneg %p113
      %p120 = scmp.eq.s32.totalorder %s15, 3
      %p121 = por %p119, %p120
      %p122 = scmp.ne.s32.totalorder %s114, %s117
      %p123 = scmp.eq.s32.totalorder %s15, 0
      %p124 = por %p122, %p123
      %p125 = scmp.ne.s32.totalorder %s114, %s117
      %p126 = scmp.eq.s32.totalorder %s20, 3
      %p127 = por %p125, %p126
      %p128 = scmp.ne.s32.totalorder %s117, %s118
      %p129 = scmp.eq.s32.totalorder %s20, 0
      %p130 = por %p128, %p129
      %p131 = scmp.ne.s32.totalorder %s117, %s118
      %p132 = scmp.eq.s32.totalorder %s21, 3
      %p133 = por %p131, %p132
      %p135 = scmp.ne.s32.totalorder %s118, %s134
      %p136 = scmp.eq.s32.totalorder %s21, 0
      %p137 = por %p135, %p136
      %p138 = scmp.le.s32.totalorder 1, %s15
      %p139 = scmp.lt.s32.totalorder %s15, 5
      %p140 = pnand %p138, %p139
      %p141 = pneg %p140
      // Predicated region
      $region9: #{tpu_custom_call.1} parent=5 // pred_check
        _
      $region10: #{tpu_custom_call.1} parent=5 // pred_check_branch
        %143 = sbr.rel (%p140) target = $region12
      $region11: #{tpu_custom_call.1} parent=5 // pred_region
        %s144 = ssub.s32 %s15, 1
        // Predicated region
        $region13: #{tpu_custom_call.1} parent=11 // pred_check
          %p145 = pneg %p76
        $region14: #{tpu_custom_call.1} parent=11 // pred_check_branch
          %147 = sbr.rel (%p145) target = $region16
        $region15: #{tpu_custom_call.1} parent=11 // pred_region
          _
        $region16: #{tpu_custom_call.1} parent=11 // pred_fallthru
          _
      $region12: #{tpu_custom_call.1} parent=5 // pred_fallthru
        _
      %p148 = scmp.lt.s32.totalorder %s15, 4
      // Predicated region
      $region17: #{tpu_custom_call.1} parent=5 // pred_check
        %p149 = pneg %p148
      $region18: #{tpu_custom_call.1} parent=5 // pred_check_branch
        %151 = sbr.rel (%p149) target = $region20
      $region19: #{tpu_custom_call.1} parent=5 // pred_region
        // Predicated region
        $region21: #{tpu_custom_call.1} parent=19 // pred_check
          %p152 = pneg %p49
        $region22: #{tpu_custom_call.1} parent=19 // pred_check_branch
          %154 = sbr.rel (%p152) target = $region24
        $region23: #{tpu_custom_call.1} parent=19 // pred_region
          %s155 = smul.u32 2, %s23
          %p156 = scmp.lt.s32.totalorder %s22, 1
          %s157 = scalar_select %p156, %s22, 1
          %p158 = scmp.lt.s32.totalorder %s155, 3
          %s159 = scalar_select %p158, %s155, 3
          %s160 = smul.addr %s157, 4
          %s161 = sadd.s32 %s159, %s160
          %s162 = smul.addr %s161, 8
          %s163 = scalar_lea.vmem %s0, %s162
          %s164 = smul.u32 2, %s23
        $region24: #{tpu_custom_call.1} parent=19 // pred_fallthru
          _
        // Predicated region
        $region25: #{tpu_custom_call.1} parent=19 // pred_check
          %p165 = pneg %p96
        $region26: #{tpu_custom_call.1} parent=19 // pred_check_branch
          %167 = sbr.rel (%p165) target = $region28
        $region27: #{tpu_custom_call.1} parent=19 // pred_region
          %s168 = sand.u32 %s86, 1
          %s169 = scalar_lea.sflag [#allocation3], %s168
          %s170 = sand.u32 %s86, 1
          %s171 = smul.addr %s170, 16
          %s172 = scalar_lea.vmem [#allocation2], %s171
          %s173 = smul.u32 2, %s23
          %s175 = ssub.s32 256, 256
          %176 = vsyncadd %s169, %s175
          %s177 = smul.addr %s173, 128
          %s178 = scalar_lea.hbm %s2, %s177
          %s179 = sshll.u32 %s172, 4
          %s180 = int_to_ptr.vmem [resolvable:$true] %s179
          %185 = dma.hbm_to_vmem [thread:$0]  %s178, 256, %s180, %s169, 128, 128, 8
        $region28: #{tpu_custom_call.1} parent=19 // pred_fallthru
          _
      $region20: #{tpu_custom_call.1} parent=5 // pred_fallthru
        _
      %p186 = scmp.le.s32.totalorder 1, %s15
      %p187 = scmp.lt.s32.totalorder %s15, 5
      %p188 = pnand %p186, %p187
      %p189 = pneg %p188
      // Predicated region
      $region29: #{tpu_custom_call.1} parent=5 // pred_check
        _
      $region30: #{tpu_custom_call.1} parent=5 // pred_check_branch
        %191 = sbr.rel (%p188) target = $region32
      $region31: #{tpu_custom_call.1} parent=5 // pred_region
        %s192 = ssub.s32 %s15, 1
        %s193 = sand.u32 %s89, 1
        %s194 = scalar_lea.sflag [#allocation3], %s193
        %s195 = sand.u32 %s89, 1
        %s196 = smul.addr %s195, 16
        %s197 = scalar_lea.vmem [#allocation2], %s196
        // Predicated region
        $region33: #{tpu_custom_call.1} parent=31 // pred_check
          %p198 = pneg %p102
        $region34: #{tpu_custom_call.1} parent=31 // pred_check_branch
          %200 = sbr.rel (%p198) target = $region36
        $region35: #{tpu_custom_call.1} parent=31 // pred_region
          %201 = dma.done %s194, 256
        $region36: #{tpu_custom_call.1} parent=31 // pred_fallthru
          _
        %s202 = smul.u32 2, %s25
        %p203 = scmp.lt.s32.totalorder %s24, 1
        %s204 = scalar_select %p203, %s24, 1
        %p205 = scmp.lt.s32.totalorder %s202, 3
        %s206 = scalar_select %p205, %s202, 3
        %s207 = smul.addr %s204, 4
        %s208 = sadd.s32 %s206, %s207
        %s209 = smul.addr %s208, 8
        %s210 = scalar_lea.vmem %s0, %s209
        %p211 = pneg %p55
        %p212 = pneg %p52
        %p213 = pneg %p76
        %p214 = pneg %p73
        %s215 = sand.u32 %s89, 1
        %s216 = scalar_lea.sflag [#allocation3], %s215
        %s217 = sand.u32 %s89, 1
        %s218 = smul.addr %s217, 16
        %s219 = scalar_lea.vmem [#allocation2], %s218
        %p220 = pneg %p102
        %p221 = pneg %p99
        %p222 = pneg %p130
        %p223 = pneg %p127
        %s224 = sand.u32 %s117, 1
        %s225 = scalar_lea.sflag [#allocation4], %s224
        %s226 = sand.u32 %s117, 1
        %s227 = smul.addr %s226, 16
        %s228 = scalar_lea.vmem [#allocation5], %s227
        %s229 = smul.u32 2, %s25
        %p230 = scmp.lt.s32.totalorder %s24, 1
        %s231 = scalar_select %p230, %s24, 1
        %p232 = scmp.lt.s32.totalorder %s229, 3
        %s233 = scalar_select %p232, %s229, 3
        %s234 = smul.addr %s231, 4
        %s235 = sadd.s32 %s233, %s234
        %s236 = smul.addr %s235, 8
        %s237 = scalar_lea.vmem %s0, %s236
        %s238 = smul.u32 2, %s25
        %s239 = smul.u32 2, %s25
        %s240 = smul.u32 2, %s25
        %v241 = vld [vmem:[%s237] sm:$0xff]
        %v242 = vld [vmem:[%s237 + $0x8] sm:$0xff]
        %v243 = vlaneseq
        %v244 = vand.u32 %v243, 127
        %245 = vset.pattern.permute.xlu0 0
        %246 = vperm.xlu0 %245, %v241
        %v247 = vpop.permute.xlu0 %246
        %248 = vset.pattern.permute.xlu0 0
        %249 = vperm.xlu0 %248, %v242
        %v250 = vpop.permute.xlu0 %249
        %vm251 = vcmp.eq.s32.totalorder %v244, %v247
        %vm252 = vcmp.eq.s32.totalorder %v244, %v250
        %v253 = vsel %vm251, 1, 0
        %v254 = vsel %vm252, 1, 0
        %v255 = vcvt.s32.f32 %v253
        %v256 = vcvt.s32.f32 %v254
        %v257 = vld [vmem:[%s1] sm:$0xff]
        %v258 = vld [vmem:[%s1 + $0x8] sm:$0xff]
        %v259 = vld [vmem:[%s1 + $0x10] sm:$0xff]
        %v260 = vld [vmem:[%s1 + $0x18] sm:$0xff]
        %v261 = vld [vmem:[%s1 + $0x20] sm:$0xff]
        %v262 = vld [vmem:[%s1 + $0x28] sm:$0xff]
        %v263 = vld [vmem:[%s1 + $0x30] sm:$0xff]
        %v264 = vld [vmem:[%s1 + $0x38] sm:$0xff]
        %v265 = vld [vmem:[%s197] sm:$0xff]
        %v266 = vld [vmem:[%s197 + $0x8] sm:$0xff]
        %vm267 = vcmask 523264
        %v269 = vsel %vm267, %v255, 0
        %v272 = vsel %vm267, %v256, 0
        %274 = vmatprep.subr.mxu0 0.0
        %275 = vmatpush1.msra.mxu0 %v257
        %276 = vmatprep.subr.mxu0 0.0
        %277 = vmatpush1.msra.mxu0 %v258
        %278 = vmatprep.subr.mxu0 0.0
        %279 = vmatpush1.msra.mxu0 %v259
        %280 = vmatprep.subr.mxu0 0.0
        %281 = vmatpush1.msra.mxu0 %v260
        %282 = vmatprep.subr.mxu0 0.0
        %283 = vmatpush1.msra.mxu0 %v261
        %284 = vmatprep.subr.mxu0 0.0
        %285 = vmatpush1.msra.mxu0 %v262
        %286 = vmatprep.subr.mxu0 0.0
        %287 = vmatpush1.msra.mxu0 %v263
        %288 = vmatprep.subr.mxu0 0.0
        %289 = vmatpush1.msra.mxu0 %v264
        %290 = vmatprep.subr.mxu0 0.0
        %291 = vmatpush1.msra.mxu0 0.0
        %292 = vmatprep.subr.mxu0 0.0
        %293 = vmatpush1.msra.mxu0 0.0
        %294 = vmatprep.subr.mxu0 0.0
        %295 = vmatpush1.msra.mxu0 0.0
        %296 = vmatprep.subr.mxu0 0.0
        %297 = vmatpush1.msra.mxu0 0.0
        %298 = vmatprep.subr.mxu0 0.0
        %299 = vmatpush1.msra.mxu0 0.0
        %300 = vmatprep.subr.mxu0 0.0
        %301 = vmatpush1.msra.mxu0 0.0
        %302 = vmatprep.subr.mxu0 0.0
        %303 = vmatpush1.msra.mxu0 0.0
        %304 = vmatprep.subr.mxu0 0.0
        %305 = vmatpush1.msra.mxu0 0.0
        %306 = vmatprep.subr.mxu0 0.0
        %307 = vmatpush1.msra.mxu0 0.0
        %308 = vmatprep.subr.mxu0 0.0
        %309 = vmatpush1.msra.mxu0 0.0
        %310 = vmatprep.subr.mxu0 0.0
        %311 = vmatpush1.msra.mxu0 0.0
        %312 = vmatprep.subr.mxu0 0.0
        %313 = vmatpush1.msra.mxu0 0.0
        %314 = vmatprep.subr.mxu0 0.0
        %315 = vmatpush1.msra.mxu0 0.0
        %316 = vmatprep.subr.mxu0 0.0
        %317 = vmatpush1.msra.mxu0 0.0
        %318 = vmatprep.subr.mxu0 0.0
        %319 = vmatpush1.msra.mxu0 0.0
        %320 = vmatprep.subr.mxu0 0.0
        %321 = vmatpush1.msra.mxu0 0.0
        %322 = vmatprep.subr.mxu0 0.0
        %323 = vmatpush1.msra.mxu0 0.0
        %324 = vmatprep.subr.mxu0 0.0
        %325 = vmatpush1.msra.mxu0 0.0
        %326 = vmatprep.subr.mxu0 0.0
        %327 = vmatpush1.msra.mxu0 0.0
        %328 = vmatprep.subr.mxu0 0.0
        %329 = vmatpush1.msra.mxu0 0.0
        %330 = vmatprep.subr.mxu0 0.0
        %331 = vmatpush1.msra.mxu0 0.0
        %332 = vmatprep.subr.mxu0 0.0
        %333 = vmatpush1.msra.mxu0 0.0
        %334 = vmatprep.subr.mxu0 0.0
        %335 = vmatpush1.msra.mxu0 0.0
        %336 = vmatprep.subr.mxu0 0.0
        %337 = vmatpush1.msra.mxu0 0.0
        %338 = vmatprep.mubr.f32.mxu0 0.0
        %339 = vmatmul.mubr.f32.gmra.mrb[0].mxu0 %v269
        %v340 = vpop.f32.mrb[0].mxu0
        %v341 = vadd.f32 %v265, %v340
        %v342 = vpop.f32.mrb[0].mxu0
        %343 = vmatprep.mubr.f32.mxu0 0.0
        %344 = vmatmul.mubr.f32.gmra.mrb[0].mxu0 %v272
        %v345 = vpop.f32.mrb[0].mxu0
        %v346 = vadd.f32 %v266, %v345
        %v347 = vpop.f32.mrb[0].mxu0
        %348 = vdwg.mxu0
        %349 = vst [vmem:[%s228] sm:$0xff] %v341
        %350 = vst [vmem:[%s228 + $0x8] sm:$0xff] %v346
        %s351 = sand.u32 %s117, 1
        %s352 = scalar_lea.sflag [#allocation4], %s351
        %s353 = sand.u32 %s117, 1
        %s354 = smul.addr %s353, 16
        %s355 = scalar_lea.vmem [#allocation5], %s354
        // Predicated region
        $region37: #{tpu_custom_call.1} parent=31 // pred_check
          %p356 = pneg %p127
        $region38: #{tpu_custom_call.1} parent=31 // pred_check_branch
          %358 = sbr.rel (%p356) target = $region40
        $region39: #{tpu_custom_call.1} parent=31 // pred_region
          %s359 = smul.u32 2, %s25
          %s361 = ssub.s32 256, 256
          %362 = vsyncadd %s352, %s361
          %s363 = smul.addr %s24, 4
          %s364 = sadd.s32 %s359, %s363
          %s365 = smul.addr %s364, 128
          %s366 = scalar_lea.hbm %s3, %s365
          %s367 = sshll.u32 %s355, 4
          %s368 = int_to_ptr.vmem [resolvable:$true] %s367
          %373 = dma.vmem_to_hbm [thread:$0]  %s368, 256, %s366, %s352, 128, 128, 8
        $region40: #{tpu_custom_call.1} parent=31 // pred_fallthru
          _
      $region32: #{tpu_custom_call.1} parent=5 // pred_fallthru
        _
      %p374 = scmp.le.s32.totalorder 2, %s15
      // Predicated region
      $region41: #{tpu_custom_call.1} parent=5 // pred_check
        %p375 = pneg %p374
      $region42: #{tpu_custom_call.1} parent=5 // pred_check_branch
        %377 = sbr.rel (%p375) target = $region44
      $region43: #{tpu_custom_call.1} parent=5 // pred_region
        %s378 = ssub.s32 %s15, 2
        // Predicated region
        $region45: #{tpu_custom_call.1} parent=43 // pred_check
          %p379 = pneg %p133
        $region46: #{tpu_custom_call.1} parent=43 // pred_check_branch
          %381 = sbr.rel (%p379) target = $region48
        $region47: #{tpu_custom_call.1} parent=43 // pred_region
          %s382 = sand.u32 %s118, 1
          %s383 = scalar_lea.sflag [#allocation4], %s382
          %s384 = sand.u32 %s118, 1
          %s385 = smul.addr %s384, 16
          %s386 = scalar_lea.vmem [#allocation5], %s385
          %387 = dma.done %s383, 256
        $region48: #{tpu_custom_call.1} parent=43 // pred_fallthru
          _
      $region44: #{tpu_custom_call.1} parent=5 // pred_fallthru
        _
    $region6: #{tpu_custom_call.1} parent=1 // loop_footer
      %s19 = sadd.s32 1, %s15
    $region7: #{tpu_custom_call.1} parent=1 // loop_footer_branch
      %14 = sbr.rel target = $region3
    $region8: #{tpu_custom_call.1} parent=1 // loop_exit
      _
    %388 = vsyncpa [#allocation3], 1
    %s389 = scalar_lea.sflag [#allocation3], 1
    %390 = vsyncpa %s389, 1
    %391 = vsyncpa [#allocation4], 1
    %s392 = scalar_lea.sflag [#allocation4], 1
    %393 = vsyncpa %s392, 1

</llo_original>
